<compile_context>
chip_gen: v7x
topology: tpu7x:2x2x1
jax: 0.10.0
libtpu: 0.0.40
codegen_flags: <defaults>
</compile_context>

<pallas_src>
import functools

import jax
import jax.numpy as jnp
from jax import lax
from jax.experimental import pallas as pl
from jax.experimental.pallas import tpu as pltpu

_BN_EPS = 1e-5


def critic_kernel(state_ref, action_ref, w1_ref, b1_ref, w2s_ref, w2a_ref,
                  b2_ref, w3_ref, out_ref):
    # --- fcs1 + ReLU (BatchNorm already folded into w1/b1 by the wrapper) ---
    h1 = jnp.dot(state_ref[...], w1_ref[...],
                 preferred_element_type=jnp.float32) + b1_ref[...]
    h1 = jnp.maximum(h1, 0.0)                                           # (TB, F1) f32

    # --- fc2 on concat([h1, action]) + ReLU: both halves on the MXU ---
    h2 = jnp.dot(h1.astype(jnp.bfloat16), w2s_ref[...],
                 preferred_element_type=jnp.float32)
    h2 = h2 + jnp.dot(action_ref[...], w2a_ref[...],
                      preferred_element_type=jnp.float32)
    h2 = jnp.maximum(h2 + b2_ref[...], 0.0)                             # (TB, F2) f32

    # --- fc3 (N=1): VPU mul + lane reduction; bias b3 added in the wrapper ---
    q = jnp.sum(h2 * w3_ref[...], axis=-1, keepdims=True)               # (TB, 1)

    # Dropout: identity (eval).  TODO(synk): train-mode stochastic dropout p=0.2.
    # Lane-dense transposed store: (TB, 1) -> (1, TB); XLU has slack here.
    out_ref[...] = q.T.astype(out_ref.dtype)


def critic_forward(state, action, params, *, training=False, block_b=1024):
    """state: (B, S) f32, action: (B, A) f32 -> (B, 1) f32 Q-values."""
    B, S = state.shape
    A = action.shape[1]
    F1 = params["w1"].shape[1]
    F2 = params["w2s"].shape[1]

    # --- BatchNorm statistics + fold into fcs1 (tile-invariant, wrapper-side) ---
    if training:
        # train-mode BN: biased batch statistics over the FULL batch.
        mean = jnp.mean(state, axis=0, keepdims=True)
        var = jnp.mean((state - mean) ** 2, axis=0, keepdims=True)
    else:
        # eval-mode BN: running statistics (consistent with identity dropout).
        mean = params["running_mean"]
        var = params["running_var"]
    bn_scale = params["gamma"] * lax.rsqrt(var + _BN_EPS)               # (1, S)
    bn_shift = params["beta"] - mean * bn_scale                         # (1, S)
    w1f = (bn_scale.T * params["w1"]).astype(jnp.bfloat16)              # (S, F1) bf16
    b1f = bn_shift @ params["w1"] + params["b1"]                        # (1, F1) f32

    # Pre-cast inputs to bf16 (halves input DMA; MXU still accumulates in f32).
    state_b = state.astype(jnp.bfloat16)
    action_b = action.astype(jnp.bfloat16)

    # --- Batch tiling ---
    # tb must be a multiple of 128 (lane-dense transposed (1, tb) output blocks);
    # cap it near ceil(B/2) so the grid has >= 2 steps for v7x's two TensorCores.
    half = (((B + 1) // 2) + 127) // 128 * 128
    tb = max(128, min(block_b, half))
    bp = pl.cdiv(B, tb) * tb
    if bp != B:  # only pads when B is not already a multiple of tb
        state_b = jnp.pad(state_b, ((0, bp - B), (0, 0)))
        action_b = jnp.pad(action_b, ((0, bp - B), (0, 0)))
    grid = (bp // tb,)

    tiled = lambda i: (i, 0)       # batch-tiled blocks
    resident = lambda i: (0, 0)    # weights/biases: same block every step -> loaded once

    out = pl.pallas_call(
        critic_kernel,
        out_shape=jax.ShapeDtypeStruct((1, bp), jnp.float32),
        grid_spec=pltpu.PrefetchScalarGridSpec(
            num_scalar_prefetch=0,
            grid=grid,
            in_specs=[
                pl.BlockSpec((tb, S), tiled),          # state  (bf16)
                pl.BlockSpec((tb, A), tiled),          # action (bf16)
                pl.BlockSpec((S, F1), resident),       # w1 folded (bf16)
                pl.BlockSpec((1, F1), resident),       # b1 folded (f32)
                pl.BlockSpec((F1, F2), resident),      # w2s (bf16)
                pl.BlockSpec((A, F2), resident),       # w2a (bf16)
                pl.BlockSpec((1, F2), resident),       # b2 (f32)
                pl.BlockSpec((1, F2), resident),       # w3 row (f32, reduction)
            ],
            out_specs=pl.BlockSpec((1, tb), lambda i: (0, i)),
        ),
        compiler_params=pltpu.CompilerParams(
            dimension_semantics=("parallel",)),
    )(state_b, action_b, w1f, b1f,
      params["w2s"], params["w2a"], params["b2"], params["w3"])

    # fc3 bias added here (avoids a padded (1,1) VMEM block inside the kernel).
    return out[0, :B].reshape(B, 1) + params["b3"]


def init_params(key, state_size, action_size, fcs1_units, fc2_units):
    """Init mirroring the module: reset_parameters() sets only the weights of
    fcs1/fc2 (uniform +/- 1/sqrt(out_features), per hidden_init) and fc3.weight
    (uniform +/- 3e-3); biases keep PyTorch's default Linear init
    uniform(+/- 1/sqrt(in_features)); BatchNorm starts with gamma=1, beta=0,
    running_mean=0, running_var=1."""
    ks = jax.random.split(key, 8)

    def uniform(k, shape, lim):
        return jax.random.uniform(k, shape, jnp.float32, -lim, lim)

    w1 = uniform(ks[0], (fcs1_units, state_size), 1.0 / jnp.sqrt(fcs1_units))
    b1 = uniform(ks[1], (1, fcs1_units), 1.0 / jnp.sqrt(state_size))
    w2 = uniform(ks[2], (fc2_units, fcs1_units + action_size), 1.0 / jnp.sqrt(fc2_units))
    b2 = uniform(ks[3], (1, fc2_units), 1.0 / jnp.sqrt(fcs1_units + action_size))
    w3 = uniform(ks[4], (1, fc2_units), 0.003)
    b3 = uniform(ks[5], (1, 1), 1.0 / jnp.sqrt(fc2_units))

    return {
        "gamma": jnp.ones((1, state_size), jnp.float32),
        "beta": jnp.zeros((1, state_size), jnp.float32),
        "running_mean": jnp.zeros((1, state_size), jnp.float32),
        "running_var": jnp.ones((1, state_size), jnp.float32),
        # w1 kept f32 (master copy) so the BatchNorm fold is done in f32; the
        # folded weight is cast to bf16 per call in the wrapper.
        "w1": w1.T,                                            # (S, F1) f32
        "b1": b1,
        # fc2 weights pre-transposed to (in, out) and stored bf16 for the MXU.
        "w2s": w2[:, :fcs1_units].T.astype(jnp.bfloat16),      # (F1, F2)
        "w2a": w2[:, fcs1_units:].T.astype(jnp.bfloat16),      # (A, F2)
        "b2": b2,
        "w3": w3,                                              # (1, F2) f32 row
        "b3": b3,
    }


if __name__ == "__main__":
    B, STATE, ACTION = 8, 16, 4
    FCS1, FC2 = 128, 64          # small versions of the default 512 / 256

    root = jax.random.PRNGKey(0)
    k_state, k_action, k_params = jax.random.split(root, 3)

    state = jax.random.normal(k_state, (B, STATE), jnp.float32)
    action = jax.random.normal(k_action, (B, ACTION), jnp.float32)
    params = init_params(k_params, STATE, ACTION, FCS1, FC2)

    fwd = jax.jit(functools.partial(critic_forward, training=False))
    q = fwd(state, action, params)
    jax.block_until_ready(q)
    assert q.shape == (B, 1) and q.dtype == jnp.float32
    assert bool(jnp.all(jnp.isfinite(q)))

    # also exercise the training-mode (batch-stat BN) path once
    q_tr = critic_forward(state, action, params, training=True)
    jax.block_until_ready(q_tr)
    assert q_tr.shape == (B, 1)
    assert bool(jnp.all(jnp.isfinite(q_tr)))

    print("KERNEL_OK")
</pallas_src>

<mosaic_0001>
module attributes {stable_mosaic.version = 11 : i64} {
  func.func @critic_kernel(%arg0: i32, %arg1: memref<128x16xbf16, #tpu.memory_space<vmem>>, %arg2: memref<128x4xbf16, #tpu.memory_space<vmem>>, %arg3: memref<16x128xbf16, #tpu.memory_space<vmem>>, %arg4: memref<1x128xf32, #tpu.memory_space<vmem>>, %arg5: memref<128x64xbf16, #tpu.memory_space<vmem>>, %arg6: memref<4x64xbf16, #tpu.memory_space<vmem>>, %arg7: memref<1x64xf32, #tpu.memory_space<vmem>>, %arg8: memref<1x64xf32, #tpu.memory_space<vmem>>, %arg9: memref<1x128xf32, #tpu.memory_space<vmem>>) attributes {dimension_semantics = [#tpu.dimension_semantics<parallel>], iteration_bounds = array<i64: 1>, scalar_prefetch = 0 : i64, scratch_operands = 0 : i64, tpu.core_type = #tpu.core_type<tc>, window_params = [{transform_indices = @transform_0, window_bounds = array<i64: 128, 16>}, {transform_indices = @transform_1, window_bounds = array<i64: 128, 4>}, {pipeline_mode = #tpu.pipeline_mode<synchronous>, transform_indices = @transform_2, window_bounds = array<i64: 16, 128>}, {pipeline_mode = #tpu.pipeline_mode<synchronous>, transform_indices = @transform_3, window_bounds = array<i64: 1, 128>}, {pipeline_mode = #tpu.pipeline_mode<synchronous>, transform_indices = @transform_4, window_bounds = array<i64: 128, 64>}, {pipeline_mode = #tpu.pipeline_mode<synchronous>, transform_indices = @transform_5, window_bounds = array<i64: 4, 64>}, {pipeline_mode = #tpu.pipeline_mode<synchronous>, transform_indices = @transform_6, window_bounds = array<i64: 1, 64>}, {pipeline_mode = #tpu.pipeline_mode<synchronous>, transform_indices = @transform_7, window_bounds = array<i64: 1, 64>}, {transform_indices = @transform_8, window_bounds = array<i64: 1, 128>}]} {
    %c0 = arith.constant 0 : index
    %c0_0 = arith.constant 0 : index
    %0 = vector.load %arg1[%c0, %c0_0] : memref<128x16xbf16, #tpu.memory_space<vmem>>, vector<128x16xbf16>
    %c0_1 = arith.constant 0 : index
    %c0_2 = arith.constant 0 : index
    %1 = vector.load %arg3[%c0_1, %c0_2] : memref<16x128xbf16, #tpu.memory_space<vmem>>, vector<16x128xbf16>
    %cst = arith.constant dense<0.000000e+00> : vector<128x128xf32>
    %2 = tpu.matmul %0, %1, %cst {dimension_numbers = #tpu.dot_dimension_numbers<[1], [0], [0], [1], [0, 0, 1, 1], [], []>} : vector<128x16xbf16>, vector<16x128xbf16>, vector<128x128xf32> -> vector<128x128xf32>
    %c0_3 = arith.constant 0 : index
    %c0_4 = arith.constant 0 : index
    %3 = vector.load %arg4[%c0_3, %c0_4] : memref<1x128xf32, #tpu.memory_space<vmem>>, vector<1x128xf32>
    %4 = vector.broadcast %3 : vector<1x128xf32> to vector<128x128xf32>
    %5 = arith.addf %2, %4 : vector<128x128xf32>
    %cst_5 = arith.constant 0.000000e+00 : f32
    %6 = vector.broadcast %cst_5 : f32 to vector<128x128xf32>
    %7 = arith.maximumf %5, %6 : vector<128x128xf32>
    %8 = arith.truncf %7 : vector<128x128xf32> to vector<128x128xbf16>
    %c0_6 = arith.constant 0 : index
    %c0_7 = arith.constant 0 : index
    %9 = vector.load %arg5[%c0_6, %c0_7] : memref<128x64xbf16, #tpu.memory_space<vmem>>, vector<128x64xbf16>
    %cst_8 = arith.constant dense<0.000000e+00> : vector<128x64xf32>
    %10 = tpu.matmul %8, %9, %cst_8 {dimension_numbers = #tpu.dot_dimension_numbers<[1], [0], [0], [1], [0, 0, 1, 1], [], []>} : vector<128x128xbf16>, vector<128x64xbf16>, vector<128x64xf32> -> vector<128x64xf32>
    %c0_9 = arith.constant 0 : index
    %c0_10 = arith.constant 0 : index
    %11 = vector.load %arg2[%c0_9, %c0_10] : memref<128x4xbf16, #tpu.memory_space<vmem>>, vector<128x4xbf16>
    %c0_11 = arith.constant 0 : index
    %c0_12 = arith.constant 0 : index
    %12 = vector.load %arg6[%c0_11, %c0_12] : memref<4x64xbf16, #tpu.memory_space<vmem>>, vector<4x64xbf16>
    %cst_13 = arith.constant dense<0.000000e+00> : vector<128x64xf32>
    %13 = tpu.matmul %11, %12, %cst_13 {dimension_numbers = #tpu.dot_dimension_numbers<[1], [0], [0], [1], [0, 0, 1, 1], [], []>} : vector<128x4xbf16>, vector<4x64xbf16>, vector<128x64xf32> -> vector<128x64xf32>
    %14 = arith.addf %10, %13 : vector<128x64xf32>
    %c0_14 = arith.constant 0 : index
    %c0_15 = arith.constant 0 : index
    %15 = vector.load %arg7[%c0_14, %c0_15] : memref<1x64xf32, #tpu.memory_space<vmem>>, vector<1x64xf32>
    %16 = vector.broadcast %15 : vector<1x64xf32> to vector<128x64xf32>
    %17 = arith.addf %14, %16 : vector<128x64xf32>
    %cst_16 = arith.constant 0.000000e+00 : f32
    %18 = vector.broadcast %cst_16 : f32 to vector<128x64xf32>
    %19 = arith.maximumf %17, %18 : vector<128x64xf32>
    %c0_17 = arith.constant 0 : index
    %c0_18 = arith.constant 0 : index
    %20 = vector.load %arg8[%c0_17, %c0_18] : memref<1x64xf32, #tpu.memory_space<vmem>>, vector<1x64xf32>
    %21 = vector.broadcast %20 : vector<1x64xf32> to vector<128x64xf32>
    %22 = arith.mulf %19, %21 : vector<128x64xf32>
    %cst_19 = arith.constant dense<0.000000e+00> : vector<128xf32>
    %23 = vector.multi_reduction <add>, %22, %cst_19 [1] : vector<128x64xf32> to vector<128xf32>
    %24 = vector.shape_cast %23 : vector<128xf32> to vector<128x1xf32>
    %25 = tpu.transpose %24, [1, 0] : vector<128x1xf32> -> vector<1x128xf32>
    %c0_20 = arith.constant 0 : index
    %c0_21 = arith.constant 0 : index
    %26 = vector.load %arg9[%c0_20, %c0_21] : memref<1x128xf32, #tpu.memory_space<vmem>>, vector<1x128xf32>
    tpu.vector_store %arg9[%c0_20, %c0_21], %25 {strides = array<i32>} : memref<1x128xf32, #tpu.memory_space<vmem>>, vector<1x128xf32>,
    return
  }
  func.func @transform_0(%arg0: i32) -> (i32, i32) {
    %c0_i32 = arith.constant 0 : i32
    %c0_i32_0 = arith.constant 0 : i32
    return %arg0, %c0_i32 : i32, i32
  }
  func.func @transform_1(%arg0: i32) -> (i32, i32) {
    %c0_i32 = arith.constant 0 : i32
    %c0_i32_0 = arith.constant 0 : i32
    return %arg0, %c0_i32 : i32, i32
  }
  func.func @transform_2(%arg0: i32) -> (i32, i32) {
    %c0_i32 = arith.constant 0 : i32
    %c0_i32_0 = arith.constant 0 : i32
    %c0_i32_1 = arith.constant 0 : i32
    return %c0_i32, %c0_i32_0 : i32, i32
  }
  func.func @transform_3(%arg0: i32) -> (i32, i32) {
    %c0_i32 = arith.constant 0 : i32
    %c0_i32_0 = arith.constant 0 : i32
    %c0_i32_1 = arith.constant 0 : i32
    return %c0_i32, %c0_i32_0 : i32, i32
  }
  func.func @transform_4(%arg0: i32) -> (i32, i32) {
    %c0_i32 = arith.constant 0 : i32
    %c0_i32_0 = arith.constant 0 : i32
    %c0_i32_1 = arith.constant 0 : i32
    return %c0_i32, %c0_i32_0 : i32, i32
  }
  func.func @transform_5(%arg0: i32) -> (i32, i32) {
    %c0_i32 = arith.constant 0 : i32
    %c0_i32_0 = arith.constant 0 : i32
    %c0_i32_1 = arith.constant 0 : i32
    return %c0_i32, %c0_i32_0 : i32, i32
  }
  func.func @transform_6(%arg0: i32) -> (i32, i32) {
    %c0_i32 = arith.constant 0 : i32
    %c0_i32_0 = arith.constant 0 : i32
    %c0_i32_1 = arith.constant 0 : i32
    return %c0_i32, %c0_i32_0 : i32, i32
  }
  func.func @transform_7(%arg0: i32) -> (i32, i32) {
    %c0_i32 = arith.constant 0 : i32
    %c0_i32_0 = arith.constant 0 : i32
    %c0_i32_1 = arith.constant 0 : i32
    return %c0_i32, %c0_i32_0 : i32, i32
  }
  func.func @transform_8(%arg0: i32) -> (i32, i32) {
    %c0_i32 = arith.constant 0 : i32
    %c0_i32_0 = arith.constant 0 : i32
    return %c0_i32, %arg0 : i32, i32
  }
}

</mosaic_0001>

<llo_original>
// kernel: critic_forward.1
$region0: #{critic_forward.1}
  #allocation0 [shape = 'u32[]', space=smem, size = 0x4, offset = 0x4, fixed_abs, tag = 'smem constant byte address 0x4 - core index']
  #allocation1 [shape = 'u32[144,128]{1,0:T(1,128)}', space=vmem, size = 0x12000, scoped, tag = 'internal scratch']
  %s0 = inlined_call_operand.vmem [shape: bf16[128,16], index: 0, kind: input, shape index: {}]
  %s1 = inlined_call_operand.vmem [shape: bf16[128,4], index: 1, kind: input, shape index: {}]
  %s2 = inlined_call_operand.vmem [shape: bf16[16,128], index: 2, kind: input, shape index: {}]
  %s3 = inlined_call_operand.vmem [shape: f32[1,128], index: 3, kind: input, shape index: {}]
  %s4 = inlined_call_operand.vmem [shape: bf16[128,64], index: 4, kind: input, shape index: {}]
  %s5 = inlined_call_operand.vmem [shape: bf16[4,64], index: 5, kind: input, shape index: {}]
  %s6 = inlined_call_operand.vmem [shape: f32[1,64], index: 6, kind: input, shape index: {}]
  %s7 = inlined_call_operand.vmem [shape: f32[1,64], index: 7, kind: input, shape index: {}]
  %s8 = inlined_call_operand.vmem [shape: f32[1,128], index: 8, kind: output, shape index: {}]
  %s9 = sld [smem:[#allocation0]]
  $region42: #{critic_forward.1} parent=0
    _
  %s11 = ssub.s32 1, %s9
  %s12 = scalar_select 0, %s11, %s9
  // Predicated region
  $region2: #{critic_forward.1} parent=0 // pred_check
    _
  $region3: #{critic_forward.1} parent=0 // pred_check_branch
    %14 = sbr.rel (0) target = $region5
  $region4: #{critic_forward.1} parent=0 // pred_region
    _
  $region5: #{critic_forward.1} parent=0 // pred_fallthru
    _
  // Predicated region
  $region6: #{critic_forward.1} parent=0 // pred_check
    _
  $region7: #{critic_forward.1} parent=0 // pred_check_branch
    %16 = sbr.rel (0) target = $region9
  $region8: #{critic_forward.1} parent=0 // pred_region
    _
  $region9: #{critic_forward.1} parent=0 // pred_fallthru
    _
  // Predicated region
  $region10: #{critic_forward.1} parent=0 // pred_check
    _
  $region11: #{critic_forward.1} parent=0 // pred_check_branch
    %18 = sbr.rel (0) target = $region13
  $region12: #{critic_forward.1} parent=0 // pred_region
    _
  $region13: #{critic_forward.1} parent=0 // pred_fallthru
    _
  // Predicated region
  $region14: #{critic_forward.1} parent=0 // pred_check
    _
  $region15: #{critic_forward.1} parent=0 // pred_check_branch
    %20 = sbr.rel (0) target = $region17
  $region16: #{critic_forward.1} parent=0 // pred_region
    _
  $region17: #{critic_forward.1} parent=0 // pred_fallthru
    _
  // Predicated region
  $region18: #{critic_forward.1} parent=0 // pred_check
    _
  $region19: #{critic_forward.1} parent=0 // pred_check_branch
    %22 = sbr.rel (0) target = $region21
  $region20: #{critic_forward.1} parent=0 // pred_region
    _
  $region21: #{critic_forward.1} parent=0 // pred_fallthru
    _
  // Predicated region
  $region22: #{critic_forward.1} parent=0 // pred_check
    _
  $region23: #{critic_forward.1} parent=0 // pred_check_branch
    %24 = sbr.rel (0) target = $region25
  $region24: #{critic_forward.1} parent=0 // pred_region
    _
  $region25: #{critic_forward.1} parent=0 // pred_fallthru
    _
  // Predicated region
  $region26: #{critic_forward.1} parent=0 // pred_check
    _
  $region27: #{critic_forward.1} parent=0 // pred_check_branch
    %26 = sbr.rel (0) target = $region29
  $region28: #{critic_forward.1} parent=0 // pred_region
    _
  $region29: #{critic_forward.1} parent=0 // pred_fallthru
    _
  // Predicated region
  $region30: #{critic_forward.1} parent=0 // pred_check
    _
  $region31: #{critic_forward.1} parent=0 // pred_check_branch
    %28 = sbr.rel (0) target = $region33
  $region32: #{critic_forward.1} parent=0 // pred_region
    _
  $region33: #{critic_forward.1} parent=0 // pred_fallthru
    _
  %v30 = vld [vmem:[%s0] sm:$0xf]
  %v31 = vld [vmem:[%s0 + $0x4] sm:$0xf]
  %v32 = vld [vmem:[%s0 + $0x8] sm:$0xf]
  %v33 = vld [vmem:[%s0 + $0xc] sm:$0xf]
  %v34 = vld [vmem:[%s0 + $0x10] sm:$0xf]
  %v35 = vld [vmem:[%s0 + $0x14] sm:$0xf]
  %v36 = vld [vmem:[%s0 + $0x18] sm:$0xf]
  %v37 = vld [vmem:[%s0 + $0x1c] sm:$0xf]
  %v38 = vld [vmem:[%s0 + $0x20] sm:$0xf]
  %v39 = vld [vmem:[%s0 + $0x24] sm:$0xf]
  %v40 = vld [vmem:[%s0 + $0x28] sm:$0xf]
  %v41 = vld [vmem:[%s0 + $0x2c] sm:$0xf]
  %v42 = vld [vmem:[%s0 + $0x30] sm:$0xf]
  %v43 = vld [vmem:[%s0 + $0x34] sm:$0xf]
  %v44 = vld [vmem:[%s0 + $0x38] sm:$0xf]
  %v45 = vld [vmem:[%s0 + $0x3c] sm:$0xf]
  %v46 = vld [vmem:[%s2] sm:$0xf]
  %v47 = vld [vmem:[%s2 + $0x4] sm:$0xf]
  %v48 = vld [vmem:[%s3] sm:$0x1]
  %v50 = vlaneseq
  %v51 = vshrl.u32 %v50, 7
  %v52 = vsub.s32 0, %v51
  %v53 = vrot.slane %v48, %v52
  %v71 = vunpack.c.l.b16 %v30
  %v72 = vunpack.c.l.b16 %v31
  %v73 = vunpack.c.l.b16 %v32
  %v74 = vunpack.c.l.b16 %v33
  %v75 = vunpack.c.l.b16 %v34
  %v76 = vunpack.c.l.b16 %v35
  %v77 = vunpack.c.l.b16 %v36
  %v78 = vunpack.c.l.b16 %v37
  %v79 = vunpack.c.l.b16 %v38
  %v80 = vunpack.c.l.b16 %v39
  %v81 = vunpack.c.l.b16 %v40
  %v82 = vunpack.c.l.b16 %v41
  %v83 = vunpack.c.l.b16 %v42
  %v84 = vunpack.c.l.b16 %v43
  %v85 = vunpack.c.l.b16 %v44
  %v86 = vunpack.c.l.b16 %v45
  %v87 = vpack.c.b16 %v72, %v71
  %v88 = vpack.c.b16 %v74, %v73
  %v89 = vpack.c.b16 %v76, %v75
  %v90 = vpack.c.b16 %v78, %v77
  %v91 = vpack.c.b16 %v80, %v79
  %v92 = vpack.c.b16 %v82, %v81
  %v93 = vpack.c.b16 %v84, %v83
  %v94 = vpack.c.b16 %v86, %v85
  %v97 = vunpack.c.l.b16 %v46
  %v98 = vunpack.c.l.b16 %v47
  %v99 = vpack.c.b16 %v98, %v97
  %vm101 = vcmask 130048
  %v103 = vsel %vm101, %v87, 0
  %v106 = vsel %vm101, %v88, 0
  %v109 = vsel %vm101, %v89, 0
  %v112 = vsel %vm101, %v90, 0
  %v115 = vsel %vm101, %v91, 0
  %v118 = vsel %vm101, %v92, 0
  %v121 = vsel %vm101, %v93, 0
  %v124 = vsel %vm101, %v94, 0
  %126 = vmatprep.subr.bf16.mxu0 0
  %127 = vmatpush1.bf16.msra.mxu0 %v99
  %128 = vmatprep.subr.bf16.mxu0 0
  %129 = vmatpush1.bf16.msra.mxu0 0
  %130 = vmatprep.subr.bf16.mxu0 0
  %131 = vmatpush1.bf16.msra.mxu0 0
  %132 = vmatprep.subr.bf16.mxu0 0
  %133 = vmatpush1.bf16.msra.mxu0 0
  %134 = vmatprep.subr.bf16.mxu0 0
  %135 = vmatpush1.bf16.msra.mxu0 0
  %136 = vmatprep.subr.bf16.mxu0 0
  %137 = vmatpush1.bf16.msra.mxu0 0
  %138 = vmatprep.subr.bf16.mxu0 0
  %139 = vmatpush1.bf16.msra.mxu0 0
  %140 = vmatprep.subr.bf16.mxu0 0
  %141 = vmatpush1.bf16.msra.mxu0 0
  %142 = vmatprep.subr.bf16.mxu0 0
  %143 = vmatpush1.bf16.msra.mxu0 0
  %144 = vmatprep.subr.bf16.mxu0 0
  %145 = vmatpush1.bf16.msra.mxu0 0
  %146 = vmatprep.subr.bf16.mxu0 0
  %147 = vmatpush1.bf16.msra.mxu0 0
  %148 = vmatprep.subr.bf16.mxu0 0
  %149 = vmatpush1.bf16.msra.mxu0 0
  %150 = vmatprep.subr.bf16.mxu0 0
  %151 = vmatpush1.bf16.msra.mxu0 0
  %152 = vmatprep.subr.bf16.mxu0 0
  %153 = vmatpush1.bf16.msra.mxu0 0
  %154 = vmatprep.subr.bf16.mxu0 0
  %155 = vmatpush1.bf16.msra.mxu0 0
  %156 = vmatprep.subr.bf16.mxu0 0
  %157 = vmatpush1.bf16.msra.mxu0 0
  %158 = vmatprep.mubr.bf16.mxu0 0
  %159 = vmatmul.mubr.bf16.gmra.mrb[0].mxu0 %v103
  %v160 = vpop.f32.mrb[0].mxu0
  %v161 = vadd.f32 %v53, %v160
  %v162 = vpop.f32.mrb[0].mxu0
  %v163 = vpop.f32.mrb[0].mxu0
  %v164 = vadd.f32 %v53, %v163
  %v165 = vpop.f32.mrb[0].mxu0
  %166 = vmatprep.mubr.bf16.mxu0 0
  %167 = vmatmul.mubr.bf16.gmra.mrb[0].mxu0 %v106
  %v168 = vpop.f32.mrb[0].mxu0
  %v169 = vadd.f32 %v53, %v168
  %v170 = vpop.f32.mrb[0].mxu0
  %v171 = vpop.f32.mrb[0].mxu0
  %v172 = vadd.f32 %v53, %v171
  %v173 = vpop.f32.mrb[0].mxu0
  %174 = vmatprep.mubr.bf16.mxu0 0
  %175 = vmatmul.mubr.bf16.gmra.mrb[0].mxu0 %v109
  %v176 = vpop.f32.mrb[0].mxu0
  %v177 = vadd.f32 %v53, %v176
  %v178 = vpop.f32.mrb[0].mxu0
  %v179 = vpop.f32.mrb[0].mxu0
  %v180 = vadd.f32 %v53, %v179
  %v181 = vpop.f32.mrb[0].mxu0
  %182 = vmatprep.mubr.bf16.mxu0 0
  %183 = vmatmul.mubr.bf16.gmra.mrb[0].mxu0 %v112
  %v184 = vpop.f32.mrb[0].mxu0
  %v185 = vadd.f32 %v53, %v184
  %v186 = vpop.f32.mrb[0].mxu0
  %v187 = vpop.f32.mrb[0].mxu0
  %v188 = vadd.f32 %v53, %v187
  %v189 = vpop.f32.mrb[0].mxu0
  %190 = vmatprep.mubr.bf16.mxu0 0
  %191 = vmatmul.mubr.bf16.gmra.mrb[0].mxu0 %v115
  %v192 = vpop.f32.mrb[0].mxu0
  %v193 = vadd.f32 %v53, %v192
  %v194 = vpop.f32.mrb[0].mxu0
  %v195 = vpop.f32.mrb[0].mxu0
  %v196 = vadd.f32 %v53, %v195
  %v197 = vpop.f32.mrb[0].mxu0
  %198 = vmatprep.mubr.bf16.mxu0 0
  %199 = vmatmul.mubr.bf16.gmra.mrb[0].mxu0 %v118
  %v200 = vpop.f32.mrb[0].mxu0
  %v201 = vadd.f32 %v53, %v200
  %v202 = vpop.f32.mrb[0].mxu0
  %v203 = vpop.f32.mrb[0].mxu0
  %v204 = vadd.f32 %v53, %v203
  %v205 = vpop.f32.mrb[0].mxu0
  %206 = vmatprep.mubr.bf16.mxu0 0
  %207 = vmatmul.mubr.bf16.gmra.mrb[0].mxu0 %v121
  %v208 = vpop.f32.mrb[0].mxu0
  %v209 = vadd.f32 %v53, %v208
  %v210 = vpop.f32.mrb[0].mxu0
  %v211 = vpop.f32.mrb[0].mxu0
  %v212 = vadd.f32 %v53, %v211
  %v213 = vpop.f32.mrb[0].mxu0
  %214 = vmatprep.mubr.bf16.mxu0 0
  %215 = vmatmul.mubr.bf16.gmra.mrb[0].mxu0 %v124
  %v216 = vpop.f32.mrb[0].mxu0
  %v217 = vadd.f32 %v53, %v216
  %v218 = vpop.f32.mrb[0].mxu0
  %v219 = vpop.f32.mrb[0].mxu0
  %v220 = vadd.f32 %v53, %v219
  %v221 = vpop.f32.mrb[0].mxu0
  %222 = vdwg.mxu0
  %v223 = vmax.f32 %v161, 0.0
  %v224 = vmax.f32 %v164, 0.0
  %v225 = vmax.f32 %v169, 0.0
  %v226 = vmax.f32 %v172, 0.0
  %v227 = vmax.f32 %v177, 0.0
  %v228 = vmax.f32 %v180, 0.0
  %v229 = vmax.f32 %v185, 0.0
  %v230 = vmax.f32 %v188, 0.0
  %v231 = vmax.f32 %v193, 0.0
  %v232 = vmax.f32 %v196, 0.0
  %v233 = vmax.f32 %v201, 0.0
  %v234 = vmax.f32 %v204, 0.0
  %v235 = vmax.f32 %v209, 0.0
  %v236 = vmax.f32 %v212, 0.0
  %v237 = vmax.f32 %v217, 0.0
  %v238 = vmax.f32 %v220, 0.0
  %v239 = vpack.c.bf16 %v224, %v223
  %v240 = vpack.c.bf16 %v226, %v225
  %v241 = vpack.c.bf16 %v228, %v227
  %v242 = vpack.c.bf16 %v230, %v229
  %v243 = vpack.c.bf16 %v232, %v231
  %v244 = vpack.c.bf16 %v234, %v233
  %v245 = vpack.c.bf16 %v236, %v235
  %v246 = vpack.c.bf16 %v238, %v237
  %v247 = vld [vmem:[%s4] sm:$0xf]
  %v248 = vld [vmem:[%s4 + $0x4] sm:$0xf]
  %v249 = vld [vmem:[%s4 + $0x8] sm:$0xf]
  %v250 = vld [vmem:[%s4 + $0xc] sm:$0xf]
  %v251 = vld [vmem:[%s4 + $0x10] sm:$0xf]
  %v252 = vld [vmem:[%s4 + $0x14] sm:$0xf]
  %v253 = vld [vmem:[%s4 + $0x18] sm:$0xf]
  %v254 = vld [vmem:[%s4 + $0x1c] sm:$0xf]
  %v255 = vld [vmem:[%s4 + $0x20] sm:$0xf]
  %v256 = vld [vmem:[%s4 + $0x24] sm:$0xf]
  %v257 = vld [vmem:[%s4 + $0x28] sm:$0xf]
  %v258 = vld [vmem:[%s4 + $0x2c] sm:$0xf]
  %v259 = vld [vmem:[%s4 + $0x30] sm:$0xf]
  %v260 = vld [vmem:[%s4 + $0x34] sm:$0xf]
  %v261 = vld [vmem:[%s4 + $0x38] sm:$0xf]
  %v262 = vld [vmem:[%s4 + $0x3c] sm:$0xf]
  %v263 = vld [vmem:[%s1] sm:$0xf]
  %v264 = vld [vmem:[%s1 + $0x4] sm:$0xf]
  %v265 = vld [vmem:[%s1 + $0x8] sm:$0xf]
  %v266 = vld [vmem:[%s1 + $0xc] sm:$0xf]
  %v267 = vld [vmem:[%s1 + $0x10] sm:$0xf]
  %v268 = vld [vmem:[%s1 + $0x14] sm:$0xf]
  %v269 = vld [vmem:[%s1 + $0x18] sm:$0xf]
  %v270 = vld [vmem:[%s1 + $0x1c] sm:$0xf]
  %v271 = vld [vmem:[%s1 + $0x20] sm:$0xf]
  %v272 = vld [vmem:[%s1 + $0x24] sm:$0xf]
  %v273 = vld [vmem:[%s1 + $0x28] sm:$0xf]
  %v274 = vld [vmem:[%s1 + $0x2c] sm:$0xf]
  %v275 = vld [vmem:[%s1 + $0x30] sm:$0xf]
  %v276 = vld [vmem:[%s1 + $0x34] sm:$0xf]
  %v277 = vld [vmem:[%s1 + $0x38] sm:$0xf]
  %v278 = vld [vmem:[%s1 + $0x3c] sm:$0xf]
  %v279 = vld [vmem:[%s5] sm:$0x3]
  %v296 = vunpack.c.l.b16 %v263
  %v297 = vunpack.c.l.b16 %v264
  %v298 = vunpack.c.l.b16 %v265
  %v299 = vunpack.c.l.b16 %v266
  %v300 = vunpack.c.l.b16 %v267
  %v301 = vunpack.c.l.b16 %v268
  %v302 = vunpack.c.l.b16 %v269
  %v303 = vunpack.c.l.b16 %v270
  %v304 = vunpack.c.l.b16 %v271
  %v305 = vunpack.c.l.b16 %v272
  %v306 = vunpack.c.l.b16 %v273
  %v307 = vunpack.c.l.b16 %v274
  %v308 = vunpack.c.l.b16 %v275
  %v309 = vunpack.c.l.b16 %v276
  %v310 = vunpack.c.l.b16 %v277
  %v311 = vunpack.c.l.b16 %v278
  %v312 = vpack.c.b16 %v297, %v296
  %v313 = vpack.c.b16 %v299, %v298
  %v314 = vpack.c.b16 %v301, %v300
  %v315 = vpack.c.b16 %v303, %v302
  %v316 = vpack.c.b16 %v305, %v304
  %v317 = vpack.c.b16 %v307, %v306
  %v318 = vpack.c.b16 %v309, %v308
  %v319 = vpack.c.b16 %v311, %v310
  %vm320 = vcmask 31744
  %v322 = vsel %vm320, %v312, 0
  %v325 = vsel %vm320, %v313, 0
  %v328 = vsel %vm320, %v314, 0
  %v331 = vsel %vm320, %v315, 0
  %v334 = vsel %vm320, %v316, 0
  %v337 = vsel %vm320, %v317, 0
  %v340 = vsel %vm320, %v318, 0
  %v343 = vsel %vm320, %v319, 0
  %vm345 = vcmask 1041408
  %v347 = vsel %vm345, %v279, 0
  %349 = vmatprep.subr.bf16.mxu0 0
  %350 = vmatpush1.bf16.msra.mxu0 %v347
  %351 = vmatprep.subr.bf16.mxu0 0
  %352 = vmatpush1.bf16.msra.mxu0 0
  %353 = vmatprep.subr.bf16.mxu0 0
  %354 = vmatpush1.bf16.msra.mxu0 0
  %355 = vmatprep.subr.bf16.mxu0 0
  %356 = vmatpush1.bf16.msra.mxu0 0
  %357 = vmatprep.subr.bf16.mxu0 0
  %358 = vmatpush1.bf16.msra.mxu0 0
  %359 = vmatprep.subr.bf16.mxu0 0
  %360 = vmatpush1.bf16.msra.mxu0 0
  %361 = vmatprep.subr.bf16.mxu0 0
  %362 = vmatpush1.bf16.msra.mxu0 0
  %363 = vmatprep.subr.bf16.mxu0 0
  %364 = vmatpush1.bf16.msra.mxu0 0
  %365 = vmatprep.subr.bf16.mxu0 0
  %366 = vmatpush1.bf16.msra.mxu0 0
  %367 = vmatprep.subr.bf16.mxu0 0
  %368 = vmatpush1.bf16.msra.mxu0 0
  %369 = vmatprep.subr.bf16.mxu0 0
  %370 = vmatpush1.bf16.msra.mxu0 0
  %371 = vmatprep.subr.bf16.mxu0 0
  %372 = vmatpush1.bf16.msra.mxu0 0
  %373 = vmatprep.subr.bf16.mxu0 0
  %374 = vmatpush1.bf16.msra.mxu0 0
  %375 = vmatprep.subr.bf16.mxu0 0
  %376 = vmatpush1.bf16.msra.mxu0 0
  %377 = vmatprep.subr.bf16.mxu0 0
  %378 = vmatpush1.bf16.msra.mxu0 0
  %379 = vmatprep.subr.bf16.mxu0 0
  %380 = vmatpush1.bf16.msra.mxu0 0
  %381 = vmatprep.mubr.bf16.mxu0 0
  %382 = vmatmul.mubr.bf16.gmra.mrb[0].mxu0 %v322
  %v383 = vpop.f32.mrb[0].mxu0
  %v384 = vadd.f32 0.0, %v383
  %v385 = vpop.f32.mrb[0].mxu0
  %v386 = vpop.f32.mrb[0].mxu0
  %v387 = vadd.f32 0.0, %v386
  %v388 = vpop.f32.mrb[0].mxu0
  %389 = vmatprep.mubr.bf16.mxu0 0
  %390 = vmatmul.mubr.bf16.gmra.mrb[0].mxu0 %v325
  %v391 = vpop.f32.mrb[0].mxu0
  %v392 = vadd.f32 0.0, %v391
  %v393 = vpop.f32.mrb[0].mxu0
  %v394 = vpop.f32.mrb[0].mxu0
  %v395 = vadd.f32 0.0, %v394
  %v396 = vpop.f32.mrb[0].mxu0
  %397 = vmatprep.mubr.bf16.mxu0 0
  %398 = vmatmul.mubr.bf16.gmra.mrb[0].mxu0 %v328
  %v399 = vpop.f32.mrb[0].mxu0
  %v400 = vadd.f32 0.0, %v399
  %v401 = vpop.f32.mrb[0].mxu0
  %v402 = vpop.f32.mrb[0].mxu0
  %v403 = vadd.f32 0.0, %v402
  %v404 = vpop.f32.mrb[0].mxu0
  %405 = vmatprep.mubr.bf16.mxu0 0
  %406 = vmatmul.mubr.bf16.gmra.mrb[0].mxu0 %v331
  %v407 = vpop.f32.mrb[0].mxu0
  %v408 = vadd.f32 0.0, %v407
  %v409 = vpop.f32.mrb[0].mxu0
  %v410 = vpop.f32.mrb[0].mxu0
  %v411 = vadd.f32 0.0, %v410
  %v412 = vpop.f32.mrb[0].mxu0
  %413 = vmatprep.mubr.bf16.mxu0 0
  %414 = vmatmul.mubr.bf16.gmra.mrb[0].mxu0 %v334
  %v415 = vpop.f32.mrb[0].mxu0
  %v416 = vadd.f32 0.0, %v415
  %v417 = vpop.f32.mrb[0].mxu0
  %v418 = vpop.f32.mrb[0].mxu0
  %v419 = vadd.f32 0.0, %v418
  %v420 = vpop.f32.mrb[0].mxu0
  %421 = vmatprep.mubr.bf16.mxu0 0
  %422 = vmatmul.mubr.bf16.gmra.mrb[0].mxu0 %v337
  %v423 = vpop.f32.mrb[0].mxu0
  %v424 = vadd.f32 0.0, %v423
  %v425 = vpop.f32.mrb[0].mxu0
  %v426 = vpop.f32.mrb[0].mxu0
  %v427 = vadd.f32 0.0, %v426
  %v428 = vpop.f32.mrb[0].mxu0
  %429 = vmatprep.mubr.bf16.mxu0 0
  %430 = vmatmul.mubr.bf16.gmra.mrb[0].mxu0 %v340
  %v431 = vpop.f32.mrb[0].mxu0
  %v432 = vadd.f32 0.0, %v431
  %v433 = vpop.f32.mrb[0].mxu0
  %v434 = vpop.f32.mrb[0].mxu0
  %v435 = vadd.f32 0.0, %v434
  %v436 = vpop.f32.mrb[0].mxu0
  %437 = vmatprep.mubr.bf16.mxu0 0
  %438 = vmatmul.mubr.bf16.gmra.mrb[0].mxu0 %v343
  %v439 = vpop.f32.mrb[0].mxu0
  %v440 = vadd.f32 0.0, %v439
  %v441 = vpop.f32.mrb[0].mxu0
  %v442 = vpop.f32.mrb[0].mxu0
  %v443 = vadd.f32 0.0, %v442
  %v444 = vpop.f32.mrb[0].mxu0
  %445 = vdwg.mxu0
  %v462 = vunpack.c.l.b16 %v247
  %v463 = vunpack.c.l.b16 %v248
  %v464 = vunpack.c.l.b16 %v249
  %v465 = vunpack.c.l.b16 %v250
  %v466 = vunpack.c.l.b16 %v251
  %v467 = vunpack.c.l.b16 %v252
  %v468 = vunpack.c.l.b16 %v253
  %v469 = vunpack.c.l.b16 %v254
  %v470 = vunpack.c.l.b16 %v255
  %v471 = vunpack.c.l.b16 %v256
  %v472 = vunpack.c.l.b16 %v257
  %v473 = vunpack.c.l.b16 %v258
  %v474 = vunpack.c.l.b16 %v259
  %v475 = vunpack.c.l.b16 %v260
  %v476 = vunpack.c.l.b16 %v261
  %v477 = vunpack.c.l.b16 %v262
  %v478 = vpack.c.b16 %v463, %v462
  %v479 = vpack.c.b16 %v465, %v464
  %v480 = vpack.c.b16 %v467, %v466
  %v481 = vpack.c.b16 %v469, %v468
  %v482 = vpack.c.b16 %v471, %v470
  %v483 = vpack.c.b16 %v473, %v472
  %v484 = vpack.c.b16 %v475, %v474
  %v485 = vpack.c.b16 %v477, %v476
  %494 = vmatprep.subr.bf16.mxu0 0
  %495 = vmatpush1.bf16.msra.mxu0 %v478
  %496 = vmatprep.subr.bf16.mxu0 0
  %497 = vmatpush1.bf16.msra.mxu0 %v479
  %498 = vmatprep.subr.bf16.mxu0 0
  %499 = vmatpush1.bf16.msra.mxu0 %v480
  %500 = vmatprep.subr.bf16.mxu0 0
  %501 = vmatpush1.bf16.msra.mxu0 %v481
  %502 = vmatprep.subr.bf16.mxu0 0
  %503 = vmatpush1.bf16.msra.mxu0 %v482
  %504 = vmatprep.subr.bf16.mxu0 0
  %505 = vmatpush1.bf16.msra.mxu0 %v483
  %506 = vmatprep.subr.bf16.mxu0 0
  %507 = vmatpush1.bf16.msra.mxu0 %v484
  %508 = vmatprep.subr.bf16.mxu0 0
  %509 = vmatpush1.bf16.msra.mxu0 %v485
  %510 = vmatprep.subr.bf16.mxu0 0
  %511 = vmatpush1.bf16.msra.mxu0 0
  %512 = vmatprep.subr.bf16.mxu0 0
  %513 = vmatpush1.bf16.msra.mxu0 0
  %514 = vmatprep.subr.bf16.mxu0 0
  %515 = vmatpush1.bf16.msra.mxu0 0
  %516 = vmatprep.subr.bf16.mxu0 0
  %517 = vmatpush1.bf16.msra.mxu0 0
  %518 = vmatprep.subr.bf16.mxu0 0
  %519 = vmatpush1.bf16.msra.mxu0 0
  %520 = vmatprep.subr.bf16.mxu0 0
  %521 = vmatpush1.bf16.msra.mxu0 0
  %522 = vmatprep.subr.bf16.mxu0 0
  %523 = vmatpush1.bf16.msra.mxu0 0
  %524 = vmatprep.subr.bf16.mxu0 0
  %525 = vmatpush1.bf16.msra.mxu0 0
  %526 = vmatprep.mubr.bf16.mxu0 0
  %527 = vmatmul.mubr.bf16.gmra.mrb[0].mxu0 %v239
  %v528 = vpop.f32.mrb[0].mxu0
  %v529 = vadd.f32 %v384, %v528
  %v530 = vpop.f32.mrb[0].mxu0
  %v531 = vpop.f32.mrb[0].mxu0
  %v532 = vadd.f32 %v387, %v531
  %v533 = vpop.f32.mrb[0].mxu0
  %534 = vmatprep.mubr.bf16.mxu0 0
  %535 = vmatmul.mubr.bf16.gmra.mrb[0].mxu0 %v240
  %v536 = vpop.f32.mrb[0].mxu0
  %v537 = vadd.f32 %v392, %v536
  %v538 = vpop.f32.mrb[0].mxu0
  %v539 = vpop.f32.mrb[0].mxu0
  %v540 = vadd.f32 %v395, %v539
  %v541 = vpop.f32.mrb[0].mxu0
  %542 = vmatprep.mubr.bf16.mxu0 0
  %543 = vmatmul.mubr.bf16.gmra.mrb[0].mxu0 %v241
  %v544 = vpop.f32.mrb[0].mxu0
  %v545 = vadd.f32 %v400, %v544
  %v546 = vpop.f32.mrb[0].mxu0
  %v547 = vpop.f32.mrb[0].mxu0
  %v548 = vadd.f32 %v403, %v547
  %v549 = vpop.f32.mrb[0].mxu0
  %550 = vmatprep.mubr.bf16.mxu0 0
  %551 = vmatmul.mubr.bf16.gmra.mrb[0].mxu0 %v242
  %v552 = vpop.f32.mrb[0].mxu0
  %v553 = vadd.f32 %v408, %v552
  %v554 = vpop.f32.mrb[0].mxu0
  %v555 = vpop.f32.mrb[0].mxu0
  %v556 = vadd.f32 %v411, %v555
  %v557 = vpop.f32.mrb[0].mxu0
  %558 = vmatprep.mubr.bf16.mxu0 0
  %559 = vmatmul.mubr.bf16.gmra.mrb[0].mxu0 %v243
  %v560 = vpop.f32.mrb[0].mxu0
  %v561 = vadd.f32 %v416, %v560
  %v562 = vpop.f32.mrb[0].mxu0
  %v563 = vpop.f32.mrb[0].mxu0
  %v564 = vadd.f32 %v419, %v563
  %v565 = vpop.f32.mrb[0].mxu0
  %566 = vmatprep.mubr.bf16.mxu0 0
  %567 = vmatmul.mubr.bf16.gmra.mrb[0].mxu0 %v244
  %v568 = vpop.f32.mrb[0].mxu0
  %v569 = vadd.f32 %v424, %v568
  %v570 = vpop.f32.mrb[0].mxu0
  %v571 = vpop.f32.mrb[0].mxu0
  %v572 = vadd.f32 %v427, %v571
  %v573 = vpop.f32.mrb[0].mxu0
  %574 = vmatprep.mubr.bf16.mxu0 0
  %575 = vmatmul.mubr.bf16.gmra.mrb[0].mxu0 %v245
  %v576 = vpop.f32.mrb[0].mxu0
  %v577 = vadd.f32 %v432, %v576
  %v578 = vpop.f32.mrb[0].mxu0
  %v579 = vpop.f32.mrb[0].mxu0
  %v580 = vadd.f32 %v435, %v579
  %v581 = vpop.f32.mrb[0].mxu0
  %582 = vmatprep.mubr.bf16.mxu0 0
  %583 = vmatmul.mubr.bf16.gmra.mrb[0].mxu0 %v246
  %v584 = vpop.f32.mrb[0].mxu0
  %v585 = vadd.f32 %v440, %v584
  %v586 = vpop.f32.mrb[0].mxu0
  %v587 = vpop.f32.mrb[0].mxu0
  %v588 = vadd.f32 %v443, %v587
  %v589 = vpop.f32.mrb[0].mxu0
  %590 = vdwg.mxu0
  %v591 = vld [vmem:[%s6] sm:$0x1]
  %v593 = vlaneseq
  %v594 = vshrl.u32 %v593, 7
  %v595 = vsub.s32 0, %v594
  %v596 = vrot.slane %v591, %v595
  %v598 = vadd.f32 %v529, %v596
  %v599 = vadd.f32 %v532, %v596
  %v600 = vadd.f32 %v537, %v596
  %v601 = vadd.f32 %v540, %v596
  %v602 = vadd.f32 %v545, %v596
  %v603 = vadd.f32 %v548, %v596
  %v604 = vadd.f32 %v553, %v596
  %v605 = vadd.f32 %v556, %v596
  %v606 = vadd.f32 %v561, %v596
  %v607 = vadd.f32 %v564, %v596
  %v608 = vadd.f32 %v569, %v596
  %v609 = vadd.f32 %v572, %v596
  %v610 = vadd.f32 %v577, %v596
  %v611 = vadd.f32 %v580, %v596
  %v612 = vadd.f32 %v585, %v596
  %v613 = vadd.f32 %v588, %v596
  %v614 = vmax.f32 %v598, 0.0
  %v615 = vmax.f32 %v599, 0.0
  %v616 = vmax.f32 %v600, 0.0
  %v617 = vmax.f32 %v601, 0.0
  %v618 = vmax.f32 %v602, 0.0
  %v619 = vmax.f32 %v603, 0.0
  %v620 = vmax.f32 %v604, 0.0
  %v621 = vmax.f32 %v605, 0.0
  %v622 = vmax.f32 %v606, 0.0
  %v623 = vmax.f32 %v607, 0.0
  %v624 = vmax.f32 %v608, 0.0
  %v625 = vmax.f32 %v609, 0.0
  %v626 = vmax.f32 %v610, 0.0
  %v627 = vmax.f32 %v611, 0.0
  %v628 = vmax.f32 %v612, 0.0
  %v629 = vmax.f32 %v613, 0.0
  %v630 = vld [vmem:[%s7] sm:$0x1]
  %v632 = vlaneseq
  %v633 = vshrl.u32 %v632, 7
  %v634 = vsub.s32 0, %v633
  %v635 = vrot.slane %v630, %v634
  %v637 = vmul.f32 %v614, %v635
  %v638 = vmul.f32 %v615, %v635
  %v639 = vmul.f32 %v616, %v635
  %v640 = vmul.f32 %v617, %v635
  %v641 = vmul.f32 %v618, %v635
  %v642 = vmul.f32 %v619, %v635
  %v643 = vmul.f32 %v620, %v635
  %v644 = vmul.f32 %v621, %v635
  %v645 = vmul.f32 %v622, %v635
  %v646 = vmul.f32 %v623, %v635
  %v647 = vmul.f32 %v624, %v635
  %v648 = vmul.f32 %v625, %v635
  %v649 = vmul.f32 %v626, %v635
  %v650 = vmul.f32 %v627, %v635
  %v651 = vmul.f32 %v628, %v635
  %v652 = vmul.f32 %v629, %v635
  %vm653 = vcmask 523264
  %v654 = vsel %vm653, %v637, 0.0
  %655 = vadd.xlane.f32.xlu0 %v654
  %v656 = vpop.xlane.xlu0 %655
  %v657 = vsel %vm653, %v638, 0.0
  %658 = vadd.xlane.f32.xlu0 %v657
  %v659 = vpop.xlane.xlu0 %658
  %v660 = vsel %vm653, %v639, 0.0
  %661 = vadd.xlane.f32.xlu0 %v660
  %v662 = vpop.xlane.xlu0 %661
  %v663 = vsel %vm653, %v640, 0.0
  %664 = vadd.xlane.f32.xlu0 %v663
  %v665 = vpop.xlane.xlu0 %664
  %v666 = vsel %vm653, %v641, 0.0
  %667 = vadd.xlane.f32.xlu0 %v666
  %v668 = vpop.xlane.xlu0 %667
  %v669 = vsel %vm653, %v642, 0.0
  %670 = vadd.xlane.f32.xlu0 %v669
  %v671 = vpop.xlane.xlu0 %670
  %v672 = vsel %vm653, %v643, 0.0
  %673 = vadd.xlane.f32.xlu0 %v672
  %v674 = vpop.xlane.xlu0 %673
  %v675 = vsel %vm653, %v644, 0.0
  %676 = vadd.xlane.f32.xlu0 %v675
  %v677 = vpop.xlane.xlu0 %676
  %v678 = vsel %vm653, %v645, 0.0
  %679 = vadd.xlane.f32.xlu0 %v678
  %v680 = vpop.xlane.xlu0 %679
  %v681 = vsel %vm653, %v646, 0.0
  %682 = vadd.xlane.f32.xlu0 %v681
  %v683 = vpop.xlane.xlu0 %682
  %v684 = vsel %vm653, %v647, 0.0
  %685 = vadd.xlane.f32.xlu0 %v684
  %v686 = vpop.xlane.xlu0 %685
  %v687 = vsel %vm653, %v648, 0.0
  %688 = vadd.xlane.f32.xlu0 %v687
  %v689 = vpop.xlane.xlu0 %688
  %v690 = vsel %vm653, %v649, 0.0
  %691 = vadd.xlane.f32.xlu0 %v690
  %v692 = vpop.xlane.xlu0 %691
  %v693 = vsel %vm653, %v650, 0.0
  %694 = vadd.xlane.f32.xlu0 %v693
  %v695 = vpop.xlane.xlu0 %694
  %v696 = vsel %vm653, %v651, 0.0
  %697 = vadd.xlane.f32.xlu0 %v696
  %v698 = vpop.xlane.xlu0 %697
  %v699 = vsel %vm653, %v652, 0.0
  %700 = vadd.xlane.f32.xlu0 %v699
  %v701 = vpop.xlane.xlu0 %700
  %702 = vxpose.xlu0.b32.start [1/16] %v656, 128
  %703 = vxpose.xlu0.b32.cont [2/16] %v659, 128
  %704 = vxpose.xlu0.b32.cont [3/16] %v662, 128
  %705 = vxpose.xlu0.b32.cont [4/16] %v665, 128
  %706 = vxpose.xlu0.b32.cont [5/16] %v668, 128
  %707 = vxpose.xlu0.b32.cont [6/16] %v671, 128
  %708 = vxpose.xlu0.b32.cont [7/16] %v674, 128
  %709 = vxpose.xlu0.b32.cont [8/16] %v677, 128
  %710 = vxpose.xlu0.b32.cont [9/16] %v680, 128
  %711 = vxpose.xlu0.b32.cont [10/16] %v683, 128
  %712 = vxpose.xlu0.b32.cont [11/16] %v686, 128
  %713 = vxpose.xlu0.b32.cont [12/16] %v689, 128
  %714 = vxpose.xlu0.b32.cont [13/16] %v692, 128
  %715 = vxpose.xlu0.b32.cont [14/16] %v695, 128
  %716 = vxpose.xlu0.b32.cont [15/16] %v698, 128
  %717 = vxpose.xlu0.b32.end [16/16] %v701, 128
  %v718 = vpop.trf.xlu0
  %v719 = vpop.trf.xlu0
  %v720 = vpop.trf.xlu0
  %v721 = vpop.trf.xlu0
  %v722 = vpop.trf.xlu0
  %v723 = vpop.trf.xlu0
  %v724 = vpop.trf.xlu0
  %v725 = vpop.trf.xlu0
  %v726 = vpop.trf.xlu0
  %v727 = vpop.trf.xlu0
  %v728 = vpop.trf.xlu0
  %v729 = vpop.trf.xlu0
  %v730 = vpop.trf.xlu0
  %v731 = vpop.trf.xlu0
  %v732 = vpop.trf.xlu0
  %v733 = vpop.trf.xlu0
  %734 = vst [vmem:[%s8] sm:$0x1] %v718
  // Predicated region
  $region34: #{critic_forward.1} parent=0 // pred_check
    _
  $region35: #{critic_forward.1} parent=0 // pred_check_branch
    %736 = sbr.rel (0) target = $region37
  $region36: #{critic_forward.1} parent=0 // pred_region
    _
  $region37: #{critic_forward.1} parent=0 // pred_fallthru
    _
  // Predicated region
  $region38: #{critic_forward.1} parent=0 // pred_check
    _
  $region39: #{critic_forward.1} parent=0 // pred_check_branch
    %738 = sbr.rel (0) target = $region41
  $region40: #{critic_forward.1} parent=0 // pred_region
    _
  $region41: #{critic_forward.1} parent=0 // pred_fallthru
    _

</llo_original>
